<compile_context>
chip_gen: v5e
topology: v5e:2x2
jax: 0.10.0
libtpu: 0.0.40
codegen_flags: <defaults>
</compile_context>

<pallas_src>
import functools
from typing import List, Optional

import jax
import jax.numpy as jnp
from jax.experimental import pallas as pl
from jax.experimental.pallas import tpu as pltpu

_LANE = 128
_SUBLANE = 8


def _round_up(n: int, m: int) -> int:
    return ((n + m - 1) // m) * m


def _apply_act(y, act: str):
    if act == "relu":
        return jnp.maximum(y, 0.0)
    if act == "sigmoid":
        return jax.nn.sigmoid(y)
    if act == "tanh":
        return jnp.tanh(y)
    if act == "none":
        return y
    raise ValueError(f"unknown activation {act!r}")


# ----------------------------- Pallas kernel --------------------------------
def _mlp_fused_kernel(*refs, layer_has_bias, activations):
    """refs = (x_ref, w0, [b0], w1, [b1], ..., o_ref).

    One batch tile per grid step. Chains dot + bias + activation for every
    layer; intermediates never leave vregs/VMEM, only the final (lane-dense)
    tile is stored. MXU inputs are bf16, accumulator/bias/activation are f32.
    """
    x_ref = refs[0]
    o_ref = refs[-1]
    param_refs = refs[1:-1]

    h = x_ref[...]                                   # bf16 (TB, P0)
    pi = 0
    for has_b, act in zip(layer_has_bias, activations):
        w = param_refs[pi][...]                      # bf16 (P_in, P_out), resident
        pi += 1
        y = jnp.dot(h.astype(jnp.bfloat16), w,
                    preferred_element_type=jnp.float32)
        if has_b:
            y = y + param_refs[pi][...]              # f32 (1, P_out)
            pi += 1
        h = _apply_act(y, act)                       # stays f32
    o_ref[...] = h.astype(o_ref.dtype)


# ----------------------------- forward wrapper -------------------------------
def mlp_forward(x, weights, biases, *, layer_has_bias, activations, d_out):
    """x: (B, D_in) f32.  weights: padded bf16 (P_in, P_out).  biases: f32 (1, P_out)."""
    B, D_in = x.shape
    P0 = weights[0].shape[0]
    P_out = weights[-1].shape[1]

    # Batch tiling: <=256-row tiles (sublane-aligned), grid over batch.
    TB = min(256, _round_up(max(B, 1), _SUBLANE))
    B_pad = _round_up(B, TB)
    grid = (B_pad // TB,)

    # Pad batch + input features with zeros (zero cols * any weight row = 0),
    # cast the matmul input to bf16 once here.
    x_p = jnp.pad(x, ((0, B_pad - B), (0, P0 - D_in))).astype(jnp.bfloat16)

    flat_inputs = [x_p]
    in_specs = [pl.BlockSpec((TB, P0), lambda i: (i, 0))]
    bi = 0
    for li, w in enumerate(weights):
        flat_inputs.append(w)
        in_specs.append(pl.BlockSpec(w.shape, lambda i: (0, 0)))   # resident
        if layer_has_bias[li]:
            b = biases[bi]
            bi += 1
            flat_inputs.append(b)
            in_specs.append(pl.BlockSpec(b.shape, lambda i: (0, 0)))  # resident

    # VMEM budget: resident params + double-buffered x/out tiles (+2x headroom),
    # capped at the v7x per-TC 64 MiB.
    resident = sum(int(a.size) * a.dtype.itemsize for a in flat_inputs[1:])
    streamed = 2 * TB * P0 * 2 + 2 * TB * P_out * x.dtype.itemsize
    vmem_limit = int(min(max(2 * (resident + streamed), 8 << 20), 64 << 20))

    flops = 2 * B_pad * sum(w.shape[0] * w.shape[1] for w in weights)
    transc = B_pad * sum(w.shape[1] for w, a in zip(weights, activations)
                         if a in ("sigmoid", "tanh"))
    bytes_accessed = (int(x_p.size) * 2 + resident + B_pad * P_out * x.dtype.itemsize)

    kernel = functools.partial(
        _mlp_fused_kernel,
        layer_has_bias=tuple(layer_has_bias),
        activations=tuple(activations),
    )

    out_padded = pl.pallas_call(
        kernel,
        out_shape=jax.ShapeDtypeStruct((B_pad, P_out), x.dtype),
        grid_spec=pltpu.PrefetchScalarGridSpec(
            num_scalar_prefetch=0,
            grid=grid,
            in_specs=in_specs,
            out_specs=pl.BlockSpec((TB, P_out), lambda i: (i, 0)),
        ),
        compiler_params=pltpu.CompilerParams(
            dimension_semantics=("parallel",),
            vmem_limit_bytes=vmem_limit,
        ),
        cost_estimate=pl.CostEstimate(
            flops=flops, transcendentals=transc, bytes_accessed=bytes_accessed),
    )(*flat_inputs)

    return out_padded[:B, :d_out]


# ----------------------------- MLP wrapper -----------------------------------
class MLPPallas:
    """Mirror of the PyTorch MLP forward (eval mode: dropout = identity)."""

    def __init__(
        self,
        hidden_dims: List[int],
        activations: List[str],
        biases: Optional[List[bool]] = None,
        key=None,
    ):
        assert len(hidden_dims) >= 2
        n_layers = len(hidden_dims) - 1
        if biases is None:
            biases = [True] * n_layers
        if key is None:
            key = jax.random.PRNGKey(0)

        self.activations = tuple(activations)
        self.d_out = hidden_dims[-1]

        # f32 reference params (PyTorch nn.Linear-style init), W stored (D_in, D_out).
        self.params = []
        for d_in, d_out, use_b in zip(hidden_dims[:-1], hidden_dims[1:], biases):
            key, wk, bk = jax.random.split(key, 3)
            bound = 1.0 / (d_in ** 0.5)
            w = jax.random.uniform(wk, (d_in, d_out), minval=-bound, maxval=bound,
                                   dtype=jnp.float32)
            b = (jax.random.uniform(bk, (d_out,), minval=-bound, maxval=bound,
                                    dtype=jnp.float32) if use_b else None)
            self.params.append((w, b))

        # Kernel params precomputed ONCE: every feature dim padded to a 128
        # multiple (zero rows/cols), weights bf16, biases f32 (1, P_out).
        padded_dims = [max(_round_up(d, _LANE), _LANE) for d in hidden_dims]
        w_list, b_list = [], []
        for i, (w, b) in enumerate(self.params):
            p_in, p_out = padded_dims[i], padded_dims[i + 1]
            wp = jnp.pad(w, ((0, p_in - w.shape[0]), (0, p_out - w.shape[1]))
                         ).astype(jnp.bfloat16)
            w_list.append(wp)
            if b is not None:
                bp = jnp.pad(b, ((0, p_out - b.shape[0]),)).reshape(1, -1).astype(jnp.float32)
                b_list.append(bp)
        self.weights = tuple(w_list)
        self.biases = tuple(b_list)
        self.layer_has_bias = tuple(b is not None for _, b in self.params)

        self._forward = jax.jit(functools.partial(
            mlp_forward,
            layer_has_bias=self.layer_has_bias,
            activations=self.activations,
            d_out=self.d_out,
        ))

    def __call__(self, x):
        # TODO(synk): dropout omitted (module default dropouts=None / eval mode).
        return self._forward(x, self.weights, self.biases)


# ----------------------------- reference & main -------------------------------
def _ref_forward(x, params, activations, *, bf16_inputs=False):
    acts = {
        "relu": lambda v: jnp.maximum(v, 0.0),
        "sigmoid": jax.nn.sigmoid,
        "tanh": jnp.tanh,
        "none": lambda v: v,
    }
    h = x
    for (w, b), a in zip(params, activations):
        if bf16_inputs:
            h = jnp.dot(h.astype(jnp.bfloat16), w.astype(jnp.bfloat16),
                        preferred_element_type=jnp.float32)
        else:
            h = h @ w
        if b is not None:
            h = h + b
        h = acts[a](h)
    return h


if __name__ == "__main__":
    key = jax.random.PRNGKey(0)
    key, xk, xk2, pk, pk2 = jax.random.split(key, 5)

    hidden_dims = [32, 64, 32]
    activations = ["relu", "tanh"]
    B = 8

    x = jax.random.normal(xk, (B, hidden_dims[0]), dtype=jnp.float32)

    # Case 1: all biases (module default), tiny batch (single grid step).
    mlp = MLPPallas(hidden_dims, activations, key=pk)
    out = jax.block_until_ready(mlp(x))
    assert out.shape == (B, hidden_dims[-1])
    ref_bf16 = _ref_forward(x, mlp.params, activations, bf16_inputs=True)
    ref_f32 = _ref_forward(x, mlp.params, activations, bf16_inputs=False)
    assert jnp.allclose(out, ref_bf16, atol=1e-4, rtol=1e-4)
    assert jnp.allclose(out, ref_f32, atol=5e-2, rtol=5e-2)

    # Case 2: bias-less final layer + sigmoid (exercises padded-lane safety)
    # with a batch large enough to use two 256-row grid tiles.
    B2 = 260
    x2 = jax.random.normal(xk2, (B2, hidden_dims[0]), dtype=jnp.float32)
    mlp_nb = MLPPallas(hidden_dims, ["sigmoid", "none"], biases=[True, False], key=pk2)
    out_nb = jax.block_until_ready(mlp_nb(x2))
    assert out_nb.shape == (B2, hidden_dims[-1])
    ref_nb = _ref_forward(x2, mlp_nb.params, ["sigmoid", "none"], bf16_inputs=True)
    assert jnp.allclose(out_nb, ref_nb, atol=1e-4, rtol=1e-4)

    print("KERNEL_OK")
</pallas_src>

<mosaic_0001>
module attributes {stable_mosaic.version = 11 : i64} {
  func.func @_mlp_fused_kernel(%arg0: i32, %arg1: memref<8x128xbf16, #tpu.memory_space<vmem>>, %arg2: memref<128x128xbf16, #tpu.memory_space<vmem>>, %arg3: memref<1x128xf32, #tpu.memory_space<vmem>>, %arg4: memref<128x128xbf16, #tpu.memory_space<vmem>>, %arg5: memref<1x128xf32, #tpu.memory_space<vmem>>, %arg6: memref<8x128xf32, #tpu.memory_space<vmem>>) attributes {dimension_semantics = [#tpu.dimension_semantics<parallel>], iteration_bounds = array<i64: 1>, scalar_prefetch = 0 : i64, scratch_operands = 0 : i64, tpu.core_type = #tpu.core_type<tc>, window_params = [{transform_indices = @transform_0, window_bounds = array<i64: 8, 128>}, {pipeline_mode = #tpu.pipeline_mode<synchronous>, transform_indices = @transform_1, window_bounds = array<i64: 128, 128>}, {pipeline_mode = #tpu.pipeline_mode<synchronous>, transform_indices = @transform_2, window_bounds = array<i64: 1, 128>}, {pipeline_mode = #tpu.pipeline_mode<synchronous>, transform_indices = @transform_3, window_bounds = array<i64: 128, 128>}, {pipeline_mode = #tpu.pipeline_mode<synchronous>, transform_indices = @transform_4, window_bounds = array<i64: 1, 128>}, {transform_indices = @transform_5, window_bounds = array<i64: 8, 128>}]} {
    %c0 = arith.constant 0 : index
    %c0_0 = arith.constant 0 : index
    %0 = vector.load %arg1[%c0, %c0_0] : memref<8x128xbf16, #tpu.memory_space<vmem>>, vector<8x128xbf16>
    %c0_1 = arith.constant 0 : index
    %c0_2 = arith.constant 0 : index
    %1 = vector.load %arg2[%c0_1, %c0_2] : memref<128x128xbf16, #tpu.memory_space<vmem>>, vector<128x128xbf16>
    %cst = arith.constant dense<0.000000e+00> : vector<8x128xf32>
    %2 = tpu.matmul %0, %1, %cst {dimension_numbers = #tpu.dot_dimension_numbers<[1], [0], [0], [1], [0, 0, 1, 1], [], []>} : vector<8x128xbf16>, vector<128x128xbf16>, vector<8x128xf32> -> vector<8x128xf32>
    %c0_3 = arith.constant 0 : index
    %c0_4 = arith.constant 0 : index
    %3 = vector.load %arg3[%c0_3, %c0_4] : memref<1x128xf32, #tpu.memory_space<vmem>>, vector<1x128xf32>
    %4 = vector.broadcast %3 : vector<1x128xf32> to vector<8x128xf32>
    %5 = arith.addf %2, %4 : vector<8x128xf32>
    %cst_5 = arith.constant 0.000000e+00 : f32
    %6 = vector.broadcast %cst_5 : f32 to vector<8x128xf32>
    %7 = arith.maximumf %5, %6 : vector<8x128xf32>
    %c0_6 = arith.constant 0 : index
    %c0_7 = arith.constant 0 : index
    %8 = vector.load %arg4[%c0_6, %c0_7] : memref<128x128xbf16, #tpu.memory_space<vmem>>, vector<128x128xbf16>
    %9 = arith.truncf %7 : vector<8x128xf32> to vector<8x128xbf16>
    %cst_8 = arith.constant dense<0.000000e+00> : vector<8x128xf32>
    %10 = tpu.matmul %9, %8, %cst_8 {dimension_numbers = #tpu.dot_dimension_numbers<[1], [0], [0], [1], [0, 0, 1, 1], [], []>} : vector<8x128xbf16>, vector<128x128xbf16>, vector<8x128xf32> -> vector<8x128xf32>
    %c0_9 = arith.constant 0 : index
    %c0_10 = arith.constant 0 : index
    %11 = vector.load %arg5[%c0_9, %c0_10] : memref<1x128xf32, #tpu.memory_space<vmem>>, vector<1x128xf32>
    %12 = vector.broadcast %11 : vector<1x128xf32> to vector<8x128xf32>
    %13 = arith.addf %10, %12 : vector<8x128xf32>
    %14 = math.tanh %13 : vector<8x128xf32>
    %c0_11 = arith.constant 0 : index
    %c0_12 = arith.constant 0 : index
    %15 = vector.load %arg6[%c0_11, %c0_12] : memref<8x128xf32, #tpu.memory_space<vmem>>, vector<8x128xf32>
    tpu.vector_store %arg6[%c0_11, %c0_12], %14 {strides = array<i32>} : memref<8x128xf32, #tpu.memory_space<vmem>>, vector<8x128xf32>,
    return
  }
  func.func @transform_0(%arg0: i32) -> (i32, i32) {
    %c0_i32 = arith.constant 0 : i32
    %c0_i32_0 = arith.constant 0 : i32
    return %arg0, %c0_i32 : i32, i32
  }
  func.func @transform_1(%arg0: i32) -> (i32, i32) {
    %c0_i32 = arith.constant 0 : i32
    %c0_i32_0 = arith.constant 0 : i32
    %c0_i32_1 = arith.constant 0 : i32
    return %c0_i32, %c0_i32_0 : i32, i32
  }
  func.func @transform_2(%arg0: i32) -> (i32, i32) {
    %c0_i32 = arith.constant 0 : i32
    %c0_i32_0 = arith.constant 0 : i32
    %c0_i32_1 = arith.constant 0 : i32
    return %c0_i32, %c0_i32_0 : i32, i32
  }
  func.func @transform_3(%arg0: i32) -> (i32, i32) {
    %c0_i32 = arith.constant 0 : i32
    %c0_i32_0 = arith.constant 0 : i32
    %c0_i32_1 = arith.constant 0 : i32
    return %c0_i32, %c0_i32_0 : i32, i32
  }
  func.func @transform_4(%arg0: i32) -> (i32, i32) {
    %c0_i32 = arith.constant 0 : i32
    %c0_i32_0 = arith.constant 0 : i32
    %c0_i32_1 = arith.constant 0 : i32
    return %c0_i32, %c0_i32_0 : i32, i32
  }
  func.func @transform_5(%arg0: i32) -> (i32, i32) {
    %c0_i32 = arith.constant 0 : i32
    %c0_i32_0 = arith.constant 0 : i32
    return %arg0, %c0_i32 : i32, i32
  }
}

</mosaic_0001>

<llo_original>
// kernel: mlp_forward.1
$region0: #{mlp_forward.1}
  #allocation0 [shape = 'u32[]', space=smem, size = 0x4, offset = 0x4, fixed_abs, tag = 'smem constant byte address 0x4 - core index']
  #allocation1 [shape = 'u32[72,128]{1,0:T(1,128)}', space=vmem, size = 0x9000, scoped, tag = 'internal scratch']
  %s0 = inlined_call_operand.vmem [shape: bf16[8,128], index: 0, kind: input, shape index: {}]
  %s1 = inlined_call_operand.hbm [shape: bf16[128,128], index: 1, kind: input, shape index: {}]
  %s2 = inlined_call_operand.vmem [shape: f32[1,128], index: 2, kind: input, shape index: {}]
  %s3 = inlined_call_operand.hbm [shape: bf16[128,128], index: 3, kind: input, shape index: {}]
  %s4 = inlined_call_operand.vmem [shape: f32[1,128], index: 4, kind: input, shape index: {}]
  %s5 = inlined_call_operand.hbm [shape: f32[8,128], index: 5, kind: output, shape index: {}]
  %s6 = sld [smem:[#allocation0]]
  $region38: #{mlp_forward.1} parent=0
    _
  %s8 = ssub.s32 1, %s6
  %s9 = scalar_select 0, %s8, %s6
  $region1: #{mlp_forward.1} parent=0
    #allocation2 [shape = 'u8[32768]{0}', space=vmem, size = 0x8000, scoped, tag = 'input window, operand 1, single buffered']
    #allocation3 [shape = 's32[1]{0}', space=sflag, size = 0x4, scoped, tag = 'scoped memory for mlp_forward.1']
    #allocation4 [shape = 's32[1]{0}', space=sflag, size = 0x4, scoped, tag = 'scoped memory for mlp_forward.1']
    #allocation5 [shape = 'u8[32768]{0}', space=vmem, size = 0x8000, scoped, tag = 'input window, operand 3, single buffered']
    #allocation6 [shape = 's32[1]{0}', space=sflag, size = 0x4, scoped, tag = 'scoped memory for mlp_forward.1']
    #allocation7 [shape = 'u8[4096]{0}', space=vmem, size = 0x1000, scoped, tag = 'output window, operand 0, single buffered']
    %10 = vsyncpa [#allocation3], 0
    %11 = vsyncpa [#allocation6], 0
    %12 = vsyncpa [#allocation4], 0
    // Predicated region
    $region2: #{mlp_forward.1} parent=1 // pred_check
      _
    $region3: #{mlp_forward.1} parent=1 // pred_check_branch
      %14 = sbr.rel (0) target = $region5
    $region4: #{mlp_forward.1} parent=1 // pred_region
      _
    $region5: #{mlp_forward.1} parent=1 // pred_fallthru
      _
    // Predicated region
    $region6: #{mlp_forward.1} parent=1 // pred_check
      _
    $region7: #{mlp_forward.1} parent=1 // pred_check_branch
      %16 = sbr.rel (0) target = $region9
    $region8: #{mlp_forward.1} parent=1 // pred_region
      %18 = vsyncadd [#allocation3], 0
      %s19 = sshll.u32 %s1, 4
      %s20 = int_to_ptr.hbm [resolvable:$true] %s19
      %s21 = sshll.u32 [#allocation2], 4
      %s22 = int_to_ptr.vmem [resolvable:$true] %s21
      %27 = dma.hbm_to_vmem [thread:$0]  %s20, 1024, %s22, [#allocation3], 64, 64, 4
    $region9: #{mlp_forward.1} parent=1 // pred_fallthru
      _
    // Predicated region
    $region10: #{mlp_forward.1} parent=1 // pred_check
      _
    $region11: #{mlp_forward.1} parent=1 // pred_check_branch
      %29 = sbr.rel (0) target = $region13
    $region12: #{mlp_forward.1} parent=1 // pred_region
      _
    $region13: #{mlp_forward.1} parent=1 // pred_fallthru
      _
    // Predicated region
    $region14: #{mlp_forward.1} parent=1 // pred_check
      _
    $region15: #{mlp_forward.1} parent=1 // pred_check_branch
      %31 = sbr.rel (0) target = $region17
    $region16: #{mlp_forward.1} parent=1 // pred_region
      %33 = vsyncadd [#allocation6], 0
      %s34 = sshll.u32 %s3, 4
      %s35 = int_to_ptr.hbm [resolvable:$true] %s34
      %s36 = sshll.u32 [#allocation5], 4
      %s37 = int_to_ptr.vmem [resolvable:$true] %s36
      %42 = dma.hbm_to_vmem [thread:$0]  %s35, 1024, %s37, [#allocation6], 64, 64, 4
    $region17: #{mlp_forward.1} parent=1 // pred_fallthru
      _
    // Predicated region
    $region18: #{mlp_forward.1} parent=1 // pred_check
      _
    $region19: #{mlp_forward.1} parent=1 // pred_check_branch
      %44 = sbr.rel (0) target = $region21
    $region20: #{mlp_forward.1} parent=1 // pred_region
      _
    $region21: #{mlp_forward.1} parent=1 // pred_fallthru
      _
    // Predicated region
    $region22: #{mlp_forward.1} parent=1 // pred_check
      _
    $region23: #{mlp_forward.1} parent=1 // pred_check_branch
      %46 = sbr.rel (0) target = $region25
    $region24: #{mlp_forward.1} parent=1 // pred_region
      %48 = dma.done [#allocation3], 1024
    $region25: #{mlp_forward.1} parent=1 // pred_fallthru
      _
    // Predicated region
    $region26: #{mlp_forward.1} parent=1 // pred_check
      _
    $region27: #{mlp_forward.1} parent=1 // pred_check_branch
      %50 = sbr.rel (0) target = $region29
    $region28: #{mlp_forward.1} parent=1 // pred_region
      %52 = dma.done [#allocation6], 1024
    $region29: #{mlp_forward.1} parent=1 // pred_fallthru
      _
    %v53 = vld [vmem:[%s0] sm:$0xf]
    %v54 = vld [vmem:[#allocation2] sm:$0xf]
    %v55 = vld [vmem:[#allocation2 + $0x4] sm:$0xf]
    %v56 = vld [vmem:[#allocation2 + $0x8] sm:$0xf]
    %v57 = vld [vmem:[#allocation2 + $0xc] sm:$0xf]
    %v58 = vld [vmem:[#allocation2 + $0x10] sm:$0xf]
    %v59 = vld [vmem:[#allocation2 + $0x14] sm:$0xf]
    %v60 = vld [vmem:[#allocation2 + $0x18] sm:$0xf]
    %v61 = vld [vmem:[#allocation2 + $0x1c] sm:$0xf]
    %v62 = vld [vmem:[#allocation2 + $0x20] sm:$0xf]
    %v63 = vld [vmem:[#allocation2 + $0x24] sm:$0xf]
    %v64 = vld [vmem:[#allocation2 + $0x28] sm:$0xf]
    %v65 = vld [vmem:[#allocation2 + $0x2c] sm:$0xf]
    %v66 = vld [vmem:[#allocation2 + $0x30] sm:$0xf]
    %v67 = vld [vmem:[#allocation2 + $0x34] sm:$0xf]
    %v68 = vld [vmem:[#allocation2 + $0x38] sm:$0xf]
    %v69 = vld [vmem:[#allocation2 + $0x3c] sm:$0xf]
    %v70 = vld [vmem:[%s2] sm:$0x1]
    %v72 = vperm.slane %v70, 0
    %v90 = vunpack.c.l.b16 %v54
    %v91 = vunpack.c.l.b16 %v55
    %v92 = vunpack.c.l.b16 %v56
    %v93 = vunpack.c.l.b16 %v57
    %v94 = vunpack.c.l.b16 %v58
    %v95 = vunpack.c.l.b16 %v59
    %v96 = vunpack.c.l.b16 %v60
    %v97 = vunpack.c.l.b16 %v61
    %v98 = vunpack.c.l.b16 %v62
    %v99 = vunpack.c.l.b16 %v63
    %v100 = vunpack.c.l.b16 %v64
    %v101 = vunpack.c.l.b16 %v65
    %v102 = vunpack.c.l.b16 %v66
    %v103 = vunpack.c.l.b16 %v67
    %v104 = vunpack.c.l.b16 %v68
    %v105 = vunpack.c.l.b16 %v69
    %v106 = vpack.c.b16 %v91, %v90
    %v107 = vpack.c.b16 %v93, %v92
    %v108 = vpack.c.b16 %v95, %v94
    %v109 = vpack.c.b16 %v97, %v96
    %v110 = vpack.c.b16 %v99, %v98
    %v111 = vpack.c.b16 %v101, %v100
    %v112 = vpack.c.b16 %v103, %v102
    %v113 = vpack.c.b16 %v105, %v104
    %122 = vmatpush.bf16.msra.mxu0 %v113
    %123 = vmatpush.bf16.msra.mxu0 %v112
    %124 = vmatpush.bf16.msra.mxu0 %v111
    %125 = vmatpush.bf16.msra.mxu0 %v110
    %126 = vmatpush.bf16.msra.mxu0 %v109
    %127 = vmatpush.bf16.msra.mxu0 %v108
    %128 = vmatpush.bf16.msra.mxu0 %v107
    %129 = vmatpush.bf16.msra.mxu0 %v106
    %130 = vmatmul.bf16.gmra.mxu0 %v53
    %v131 = vpop.f32.mrf.mxu0
    %v132 = vadd.f32 %v72, %v131
    %v133 = vpop.f32.mrf.mxu0
    %134 = vdwg.mxu0
    %v135 = vmax.f32 %v132, 0.0
    %v136 = vld [vmem:[#allocation5] sm:$0xf]
    %v137 = vld [vmem:[#allocation5 + $0x4] sm:$0xf]
    %v138 = vld [vmem:[#allocation5 + $0x8] sm:$0xf]
    %v139 = vld [vmem:[#allocation5 + $0xc] sm:$0xf]
    %v140 = vld [vmem:[#allocation5 + $0x10] sm:$0xf]
    %v141 = vld [vmem:[#allocation5 + $0x14] sm:$0xf]
    %v142 = vld [vmem:[#allocation5 + $0x18] sm:$0xf]
    %v143 = vld [vmem:[#allocation5 + $0x1c] sm:$0xf]
    %v144 = vld [vmem:[#allocation5 + $0x20] sm:$0xf]
    %v145 = vld [vmem:[#allocation5 + $0x24] sm:$0xf]
    %v146 = vld [vmem:[#allocation5 + $0x28] sm:$0xf]
    %v147 = vld [vmem:[#allocation5 + $0x2c] sm:$0xf]
    %v148 = vld [vmem:[#allocation5 + $0x30] sm:$0xf]
    %v149 = vld [vmem:[#allocation5 + $0x34] sm:$0xf]
    %v150 = vld [vmem:[#allocation5 + $0x38] sm:$0xf]
    %v151 = vld [vmem:[#allocation5 + $0x3c] sm:$0xf]
    %v152 = vpack.c.bf16 %v135, %v135
    %v153 = vld [vmem:[%s4] sm:$0x1]
    %v155 = vperm.slane %v153, 0
    %v173 = vunpack.c.l.b16 %v136
    %v174 = vunpack.c.l.b16 %v137
    %v175 = vunpack.c.l.b16 %v138
    %v176 = vunpack.c.l.b16 %v139
    %v177 = vunpack.c.l.b16 %v140
    %v178 = vunpack.c.l.b16 %v141
    %v179 = vunpack.c.l.b16 %v142
    %v180 = vunpack.c.l.b16 %v143
    %v181 = vunpack.c.l.b16 %v144
    %v182 = vunpack.c.l.b16 %v145
    %v183 = vunpack.c.l.b16 %v146
    %v184 = vunpack.c.l.b16 %v147
    %v185 = vunpack.c.l.b16 %v148
    %v186 = vunpack.c.l.b16 %v149
    %v187 = vunpack.c.l.b16 %v150
    %v188 = vunpack.c.l.b16 %v151
    %v189 = vpack.c.b16 %v174, %v173
    %v190 = vpack.c.b16 %v176, %v175
    %v191 = vpack.c.b16 %v178, %v177
    %v192 = vpack.c.b16 %v180, %v179
    %v193 = vpack.c.b16 %v182, %v181
    %v194 = vpack.c.b16 %v184, %v183
    %v195 = vpack.c.b16 %v186, %v185
    %v196 = vpack.c.b16 %v188, %v187
    %205 = vmatpush.bf16.msra.mxu0 %v196
    %206 = vmatpush.bf16.msra.mxu0 %v195
    %207 = vmatpush.bf16.msra.mxu0 %v194
    %208 = vmatpush.bf16.msra.mxu0 %v193
    %209 = vmatpush.bf16.msra.mxu0 %v192
    %210 = vmatpush.bf16.msra.mxu0 %v191
    %211 = vmatpush.bf16.msra.mxu0 %v190
    %212 = vmatpush.bf16.msra.mxu0 %v189
    %213 = vmatmul.bf16.gmra.mxu0 %v152
    %v214 = vpop.f32.mrf.mxu0
    %v215 = vadd.f32 %v155, %v214
    %v216 = vpop.f32.mrf.mxu0
    %217 = vdwg.mxu0
    %v218 = vtanh.pop %v215
    %219 = vst [vmem:[#allocation7] sm:$0xff] %v218
    // Predicated region
    $region30: #{mlp_forward.1} parent=1 // pred_check
      _
    $region31: #{mlp_forward.1} parent=1 // pred_check_branch
      %221 = sbr.rel (0) target = $region33
    $region32: #{mlp_forward.1} parent=1 // pred_region
      %223 = vsyncadd [#allocation4], 0
      %s225 = sshll.u32 [#allocation7], 4
      %s226 = int_to_ptr.vmem [resolvable:$true] %s225
      %s227 = sshll.u32 %s5, 4
      %s228 = int_to_ptr.hbm [resolvable:$true] %s227
      %230 = dma.vmem_to_hbm [thread:$0]  %s226, 128, %s228, [#allocation4]
    $region33: #{mlp_forward.1} parent=1 // pred_fallthru
      _
    // Predicated region
    $region34: #{mlp_forward.1} parent=1 // pred_check
      _
    $region35: #{mlp_forward.1} parent=1 // pred_check_branch
      %232 = sbr.rel (0) target = $region37
    $region36: #{mlp_forward.1} parent=1 // pred_region
      %234 = dma.done [#allocation4], 128
    $region37: #{mlp_forward.1} parent=1 // pred_fallthru
      _
    %235 = vsyncpa [#allocation3], 1
    %236 = vsyncpa [#allocation6], 1
    %237 = vsyncpa [#allocation4], 1

</llo_original>
